<compile_context>
chip_gen: v7x
topology: tpu7x:2x2x1
jax: 0.10.0
libtpu: 0.0.40
codegen_flags: <defaults>
</compile_context>

<pallas_src>
import jax
import jax.numpy as jnp
from jax import lax
from jax.experimental import pallas as pl
from jax.experimental.pallas import tpu as pltpu


def _ot_kernel(x_ref, y_ref, pi_ref, cost_ref, c_ref):
    """One grid step handles one (batch, N-tile, M-tile) block.

    x_ref:    (1, tn, D)   VMEM
    y_ref:    (1, tm, D)   VMEM
    pi_ref:   (1, tn, tm)  VMEM
    cost_ref: (1, 1, 1)    VMEM, resident across (ni, mj): per-batch accumulator
    c_ref:    (1, tn, tm)  VMEM
    """
    ni = pl.program_id(1)
    mj = pl.program_id(2)

    x = x_ref[0]                                   # (tn, D)
    y = y_ref[0]                                   # (tm, D)

    # Cheap O(N*D)/O(M*D) row norms in f32 (no-op cast if already f32).
    xf = x.astype(jnp.float32)
    yf = y.astype(jnp.float32)
    xn = jnp.sum(xf * xf, axis=-1, keepdims=True)  # (tn, 1)
    yn = jnp.sum(yf * yf, axis=-1, keepdims=True)  # (tm, 1)

    # Cross term on the MXU: contract the feature axis of both operands.
    xy = lax.dot_general(
        x, y, (((1,), (1,)), ((), ())),
        preferred_element_type=jnp.float32)        # (tn, tm)

    # ||x_i - y_j||^2 ; clamp tiny negative cancellation noise to 0.
    C = jnp.maximum(xn + yn.T - 2.0 * xy, 0.0)     # (tn, tm) f32

    c_ref[0] = C.astype(c_ref.dtype)

    # Per-tile weighted partial sum, accumulated per batch.
    partial = jnp.sum(pi_ref[0].astype(jnp.float32) * C)

    @pl.when(jnp.logical_and(ni == 0, mj == 0))
    def _():
        cost_ref[...] = jnp.zeros_like(cost_ref)

    cost_ref[...] += partial


def _pick_tile(dim, candidates):
    """Largest candidate that evenly divides `dim`, else the full dim."""
    for c in candidates:
        if dim >= c and dim % c == 0:
            return c
    return dim


def ot_distance_given_pi(x, y, pi, reduction="mean"):
    """Pallas implementation of OTDistanceGivenPI.forward (p=2)."""
    B, N, D = x.shape
    _, M, _ = y.shape
    assert y.shape == (B, M, D)
    assert pi.shape == (B, N, M)

    # tn: multiple of 8 (sublane); tm: multiple of 128 (lane-dense C stores).
    tn = _pick_tile(N, (256, 128, 64, 32, 16, 8))
    tm = _pick_tile(M, (512, 384, 256, 128))
    nb = N // tn
    mb = M // tm

    costs, C = pl.pallas_call(
        _ot_kernel,
        out_shape=(
            jax.ShapeDtypeStruct((B, 1, 1), jnp.float32),   # per-batch cost
            jax.ShapeDtypeStruct((B, N, M), x.dtype),       # cost matrix C
        ),
        grid=(B, nb, mb),
        in_specs=[
            pl.BlockSpec((1, tn, D), lambda b, ni, mj: (b, ni, 0)),   # x
            pl.BlockSpec((1, tm, D), lambda b, ni, mj: (b, mj, 0)),   # y
            pl.BlockSpec((1, tn, tm), lambda b, ni, mj: (b, ni, mj)), # pi
        ],
        out_specs=(
            pl.BlockSpec((1, 1, 1), lambda b, ni, mj: (b, 0, 0)),     # cost_b
            pl.BlockSpec((1, tn, tm), lambda b, ni, mj: (b, ni, mj)), # C
        ),
        compiler_params=pltpu.CompilerParams(
            # Batch axis has no carried state -> parallel (both TCs on v7x).
            # The N/M tile axes carry the per-batch cost accumulator -> arbitrary.
            dimension_semantics=("parallel", "arbitrary", "arbitrary"),
        ),
    )(x, y, pi)

    per_batch = costs[:, 0, 0]                      # (B,)
    if reduction == "mean":
        cost = jnp.mean(per_batch)
    elif reduction == "sum":
        cost = jnp.sum(per_batch)
    else:
        cost = per_batch
    return cost, C


def _reference(x, y, pi, reduction="mean"):
    """Pure-JAX reference matching the PyTorch semantics."""
    x_col = x[..., :, None, :]
    y_lin = y[..., None, :, :]
    C = jnp.sum(jnp.abs(x_col - y_lin) ** 2, axis=-1)
    cost = jnp.sum(pi * C, axis=(-2, -1))
    if reduction == "mean":
        cost = cost.mean()
    elif reduction == "sum":
        cost = cost.sum()
    return cost, C


if __name__ == "__main__":
    B, N, M, D = 2, 8, 16, 32

    key = jax.random.PRNGKey(0)
    kx, ky, kpi = jax.random.split(key, 3)
    x = jax.random.normal(kx, (B, N, D), dtype=jnp.float32)
    y = jax.random.normal(ky, (B, M, D), dtype=jnp.float32)
    # pi: a (non-negative, normalized) transport-plan-like tensor.
    pi = jax.nn.softmax(
        jax.random.normal(kpi, (B, N * M), dtype=jnp.float32), axis=-1
    ).reshape(B, N, M)

    cost, C = ot_distance_given_pi(x, y, pi, reduction="mean")
    cost = jax.block_until_ready(cost)
    C = jax.block_until_ready(C)

    cost_ref, C_ref = _reference(x, y, pi, reduction="mean")
    assert C.shape == (B, N, M)
    assert jnp.allclose(C, C_ref, atol=1e-4, rtol=1e-4)
    assert jnp.allclose(cost, cost_ref, atol=1e-4, rtol=1e-4)

    print("KERNEL_OK")
</pallas_src>

<mosaic_0001>
module attributes {stable_mosaic.version = 11 : i64} {
  func.func @_ot_kernel(%arg0: i32, %arg1: i32, %arg2: i32, %arg3: memref<1x8x32xf32, #tpu.memory_space<vmem>>, %arg4: memref<1x16x32xf32, #tpu.memory_space<vmem>>, %arg5: memref<1x8x16xf32, #tpu.memory_space<vmem>>, %arg6: memref<1x1x1xf32, #tpu.memory_space<vmem>>, %arg7: memref<1x8x16xf32, #tpu.memory_space<vmem>>) attributes {dimension_semantics = [#tpu.dimension_semantics<parallel>, #tpu.dimension_semantics<arbitrary>, #tpu.dimension_semantics<arbitrary>], iteration_bounds = array<i64: 2, 1, 1>, scalar_prefetch = 0 : i64, scratch_operands = 0 : i64, tpu.core_type = #tpu.core_type<tc>, window_params = [{transform_indices = @transform_0, window_bounds = array<i64: 1, 8, 32>}, {transform_indices = @transform_1, window_bounds = array<i64: 1, 16, 32>}, {transform_indices = @transform_2, window_bounds = array<i64: 1, 8, 16>}, {transform_indices = @transform_3, window_bounds = array<i64: 1, 1, 1>}, {transform_indices = @transform_4, window_bounds = array<i64: 1, 8, 16>}]} {
    %c0 = arith.constant 0 : index
    %c0_0 = arith.constant 0 : index
    %c0_1 = arith.constant 0 : index
    %0 = vector.load %arg3[%c0, %c0_0, %c0_1] : memref<1x8x32xf32, #tpu.memory_space<vmem>>, vector<1x8x32xf32>
    %1 = vector.shape_cast %0 : vector<1x8x32xf32> to vector<8x32xf32>
    %c0_2 = arith.constant 0 : index
    %c0_3 = arith.constant 0 : index
    %c0_4 = arith.constant 0 : index
    %2 = vector.load %arg4[%c0_2, %c0_3, %c0_4] : memref<1x16x32xf32, #tpu.memory_space<vmem>>, vector<1x16x32xf32>
    %3 = vector.shape_cast %2 : vector<1x16x32xf32> to vector<16x32xf32>
    %4 = arith.mulf %1, %1 : vector<8x32xf32>
    %cst = arith.constant dense<0.000000e+00> : vector<8xf32>
    %5 = vector.multi_reduction <add>, %4, %cst [1] : vector<8x32xf32> to vector<8xf32>
    %6 = vector.shape_cast %5 : vector<8xf32> to vector<8x1xf32>
    %7 = arith.mulf %3, %3 : vector<16x32xf32>
    %cst_5 = arith.constant dense<0.000000e+00> : vector<16xf32>
    %8 = vector.multi_reduction <add>, %7, %cst_5 [1] : vector<16x32xf32> to vector<16xf32>
    %9 = vector.shape_cast %8 : vector<16xf32> to vector<16x1xf32>
    %cst_6 = arith.constant dense<0.000000e+00> : vector<8x16xf32>
    %10 = tpu.matmul %1, %3, %cst_6 {dimension_numbers = #tpu.dot_dimension_numbers<[1], [1], [0], [0], [0, 0, 1, 0], [], []>} : vector<8x32xf32>, vector<16x32xf32>, vector<8x16xf32> -> vector<8x16xf32>
    %11 = tpu.transpose %9, [1, 0] : vector<16x1xf32> -> vector<1x16xf32>
    %12 = vector.broadcast %6 : vector<8x1xf32> to vector<8x16xf32>
    %13 = vector.broadcast %11 : vector<1x16xf32> to vector<8x16xf32>
    %14 = arith.addf %12, %13 : vector<8x16xf32>
    %cst_7 = arith.constant 2.000000e+00 : f32
    %15 = vector.broadcast %cst_7 : f32 to vector<8x16xf32>
    %16 = arith.mulf %15, %10 : vector<8x16xf32>
    %17 = arith.subf %14, %16 : vector<8x16xf32>
    %cst_8 = arith.constant 0.000000e+00 : f32
    %18 = vector.broadcast %cst_8 : f32 to vector<8x16xf32>
    %19 = arith.maximumf %17, %18 : vector<8x16xf32>
    %c0_9 = arith.constant 0 : index
    %c0_10 = arith.constant 0 : index
    %c0_11 = arith.constant 0 : index
    %20 = vector.load %arg7[%c0_9, %c0_10, %c0_11] : memref<1x8x16xf32, #tpu.memory_space<vmem>>, vector<1x8x16xf32>
    %21 = vector.shape_cast %20 : vector<1x8x16xf32> to vector<8x16xf32>
    %22 = vector.shape_cast %19 : vector<8x16xf32> to vector<1x8x16xf32>
    tpu.vector_store %arg7[%c0_9, %c0_10, %c0_11], %22 {strides = array<i32>} : memref<1x8x16xf32, #tpu.memory_space<vmem>>, vector<1x8x16xf32>,
    %c0_12 = arith.constant 0 : index
    %c0_13 = arith.constant 0 : index
    %c0_14 = arith.constant 0 : index
    %23 = vector.load %arg5[%c0_12, %c0_13, %c0_14] : memref<1x8x16xf32, #tpu.memory_space<vmem>>, vector<1x8x16xf32>
    %24 = vector.shape_cast %23 : vector<1x8x16xf32> to vector<8x16xf32>
    %25 = arith.mulf %24, %19 : vector<8x16xf32>
    %26 = vector.shape_cast %25 : vector<8x16xf32> to vector<1x8x16xf32>
    %cst_15 = arith.constant dense<0.000000e+00> : vector<1xf32>
    %27 = vector.multi_reduction <add>, %26, %cst_15 [1, 2] : vector<1x8x16xf32> to vector<1xf32>
    %28 = vector.shape_cast %27 : vector<1xf32> to vector<1x1x1xf32>
    %29 = vector.extract %28[0, 0, 0] : f32 from vector<1x1x1xf32>
    %c0_i32 = arith.constant 0 : i32
    %30 = arith.cmpi eq, %arg1, %c0_i32 : i32
    %c0_i32_16 = arith.constant 0 : i32
    %31 = arith.cmpi eq, %arg2, %c0_i32_16 : i32
    %32 = arith.andi %30, %31 : i1
    %33 = arith.extui %32 : i1 to i32
    %c0_i32_17 = arith.constant 0 : i32
    %34 = arith.cmpi ne, %33, %c0_i32_17 : i32
    scf.if %34 {
      %cst_24 = arith.constant 0.000000e+00 : f32
      %39 = vector.broadcast %cst_24 : f32 to vector<1x1x1xf32>
      %c0_25 = arith.constant 0 : index
      %c0_26 = arith.constant 0 : index
      %c0_27 = arith.constant 0 : index
      %40 = vector.load %arg6[%c0_25, %c0_26, %c0_27] : memref<1x1x1xf32, #tpu.memory_space<vmem>>, vector<1x1x1xf32>
      tpu.vector_store %arg6[%c0_25, %c0_26, %c0_27], %39 {strides = array<i32>} : memref<1x1x1xf32, #tpu.memory_space<vmem>>, vector<1x1x1xf32>,
    } else {
    }
    %c0_18 = arith.constant 0 : index
    %c0_19 = arith.constant 0 : index
    %c0_20 = arith.constant 0 : index
    %35 = vector.load %arg6[%c0_18, %c0_19, %c0_20] : memref<1x1x1xf32, #tpu.memory_space<vmem>>, vector<1x1x1xf32>
    %36 = vector.broadcast %29 : f32 to vector<1x1x1xf32>
    %37 = arith.addf %35, %36 : vector<1x1x1xf32>
    %c0_21 = arith.constant 0 : index
    %c0_22 = arith.constant 0 : index
    %c0_23 = arith.constant 0 : index
    %38 = vector.load %arg6[%c0_21, %c0_22, %c0_23] : memref<1x1x1xf32, #tpu.memory_space<vmem>>, vector<1x1x1xf32>
    tpu.vector_store %arg6[%c0_21, %c0_22, %c0_23], %37 {strides = array<i32>} : memref<1x1x1xf32, #tpu.memory_space<vmem>>, vector<1x1x1xf32>,
    return
  }
  func.func @transform_0(%arg0: i32, %arg1: i32, %arg2: i32) -> (i32, i32, i32) {
    %c0_i32 = arith.constant 0 : i32
    %c0_i32_0 = arith.constant 0 : i32
    return %arg0, %arg1, %c0_i32 : i32, i32, i32
  }
  func.func @transform_1(%arg0: i32, %arg1: i32, %arg2: i32) -> (i32, i32, i32) {
    %c0_i32 = arith.constant 0 : i32
    %c0_i32_0 = arith.constant 0 : i32
    return %arg0, %arg2, %c0_i32 : i32, i32, i32
  }
  func.func @transform_2(%arg0: i32, %arg1: i32, %arg2: i32) -> (i32, i32, i32) {
    %c0_i32 = arith.constant 0 : i32
    return %arg0, %arg1, %arg2 : i32, i32, i32
  }
  func.func @transform_3(%arg0: i32, %arg1: i32, %arg2: i32) -> (i32, i32, i32) {
    %c0_i32 = arith.constant 0 : i32
    %c0_i32_0 = arith.constant 0 : i32
    %c0_i32_1 = arith.constant 0 : i32
    return %arg0, %c0_i32, %c0_i32_0 : i32, i32, i32
  }
  func.func @transform_4(%arg0: i32, %arg1: i32, %arg2: i32) -> (i32, i32, i32) {
    %c0_i32 = arith.constant 0 : i32
    return %arg0, %arg1, %arg2 : i32, i32, i32
  }
}

</mosaic_0001>

<llo_original>
// kernel: tpu_custom_call.1
$region0: #{tpu_custom_call.1}
  #allocation0 [shape = 'u32[]', space=smem, size = 0x4, offset = 0x4, fixed_abs, tag = 'smem constant byte address 0x4 - core index']
  #allocation1 [shape = 'u32[144,128]{1,0:T(1,128)}', space=vmem, size = 0x12000, scoped, tag = 'internal scratch']
  %s0 = inlined_call_operand.hbm [shape: f32[2,8,32], index: 0, kind: input, shape index: {}]
  %s1 = inlined_call_operand.hbm [shape: f32[2,16,32], index: 1, kind: input, shape index: {}]
  %s2 = inlined_call_operand.hbm [shape: f32[2,8,16], index: 2, kind: input, shape index: {}]
  %s3 = inlined_call_operand.vmem [shape: f32[2,1,1], index: 3, kind: output, shape index: {0}]
  %s4 = inlined_call_operand.hbm [shape: f32[2,8,16], index: 4, kind: output, shape index: {1}]
  %5 = xla_tuple %s3, %s4
  %s6 = sld [smem:[#allocation0]]
  $region69: #{tpu_custom_call.1} parent=0
    _
  %s8 = ssub.s32 1, %s6
  %s9 = scalar_select 0, %s8, %s6
  $region1: #{tpu_custom_call.1} parent=0
    #allocation2 [shape = 'u8[8192]{0}', space=vmem, size = 0x2000, scoped, tag = 'input window, operand 0']
    #allocation3 [shape = 's32[2]{0}', space=sflag, size = 0x8, scoped, tag = 'scoped memory for tpu_custom_call.1']
    #allocation4 [shape = 's32[2]{0}', space=sflag, size = 0x8, scoped, tag = 'scoped memory for tpu_custom_call.1']
    #allocation5 [shape = 'u8[16384]{0}', space=vmem, size = 0x4000, scoped, tag = 'input window, operand 1']
    #allocation6 [shape = 's32[2]{0}', space=sflag, size = 0x8, scoped, tag = 'scoped memory for tpu_custom_call.1']
    #allocation7 [shape = 'u8[8192]{0}', space=vmem, size = 0x2000, scoped, tag = 'input window, operand 2']
    #allocation8 [shape = 'u8[8192]{0}', space=vmem, size = 0x2000, scoped, tag = 'output window, operand 1']
    %10 = vsyncpa [#allocation3], 0
    %s11 = scalar_lea.sflag [#allocation3], 1
    %12 = vsyncpa %s11, 0
    %13 = vsyncpa [#allocation6], 0
    %s14 = scalar_lea.sflag [#allocation6], 1
    %15 = vsyncpa %s14, 0
    %16 = vsyncpa [#allocation4], 0
    %s17 = scalar_lea.sflag [#allocation4], 1
    %18 = vsyncpa %s17, 0
    loop: start=0, step=1, limit=4
    $region2: #{tpu_custom_call.1} parent=1 // loop_pre_header
      _
    $region3: #{tpu_custom_call.1} parent=1 // loop_header
      %s20 = sphi 0, %s24
      %p21 = scmp.ge.s32.totalorder %s20, 4
      %s27 = sphi 0, %s46
      %s28 = sphi 0, %s42
      %s29 = sphi 0, %s38
      %s30 = sphi 0, %s27
      %s31 = sphi 0, %s28
      %s32 = sphi 0, %s29
      %s33 = sphi 0, %s30
      %s34 = sphi 0, %s31
      %s35 = sphi 0, %s32
      %s51 = sphi 0, %s53
      %s54 = sphi 0, %s51
      %s55 = sphi 0, %s54
      %s71 = sphi 0, %s55
      %s79 = sphi 0, %s81
      %s82 = sphi 0, %s79
      %s83 = sphi 0, %s82
      %s99 = sphi 0, %s83
      %s109 = sphi 0, %s111
      %s112 = sphi 0, %s109
      %s113 = sphi 0, %s112
      %s129 = sphi 0, %s113
      %s135 = sphi 0, %s137
      %s138 = sphi 0, %s135
      %s139 = sphi 0, %s138
      %s155 = sphi 0, %s139
      %s165 = sphi 0, %s167
      %s168 = sphi 0, %s165
      %s169 = sphi 0, %s168
      %s185 = sphi 0, %s169
    $region4: #{tpu_custom_call.1} parent=1 // loop_header_branch
      %23 = sbr.rel (%p21) target = $region8
    $region5: #{tpu_custom_call.1} parent=1 // loop_body
      %s25 = ssub.s32 %s20, 1
      %s26 = ssub.s32 %s20, 2
      %s36 = sadd.s32 1, %s29
      %p37 = scmp.ge.s32.totalorder %s36, 1
      %s38 = scalar_select %p37, 0, %s36
      %s39 = sadd.s32 1, %s28
      %s40 = scalar_select %p37, %s39, %s28
      %p41 = scmp.ge.s32.totalorder %s40, 1
      %s42 = scalar_select %p41, 0, %s40
      %s43 = sadd.s32 1, %s27
      %s44 = scalar_select %p41, %s43, %s27
      %p45 = scmp.ge.s32.totalorder %s44, 2
      %s46 = scalar_select %p45, 0, %s44
      %s47 = ssub.s32 %s27, %s46
      %s48 = ssub.s32 %s28, %s42
      %s49 = sor.u32 %s47, %s48
      %p50 = scmp.eq.s32.totalorder %s49, 0
      %s52 = sadd.s32 %s51, 1
      %s53 = scalar_select %p50, %s51, %s52
      %p56 = pneg %p50
      %p57 = scmp.eq.s32.totalorder %s20, 1
      %p58 = por %p56, %p57
      %p59 = scmp.ne.s32.totalorder %s51, %s54
      %p60 = scmp.eq.s32.totalorder %s20, 0
      %p61 = por %p59, %p60
      %p62 = scmp.ne.s32.totalorder %s51, %s54
      %p63 = scmp.eq.s32.totalorder %s25, 1
      %p64 = por %p62, %p63
      %p65 = scmp.ne.s32.totalorder %s54, %s55
      %p66 = scmp.eq.s32.totalorder %s25, 0
      %p67 = por %p65, %p66
      %p68 = scmp.ne.s32.totalorder %s54, %s55
      %p69 = scmp.eq.s32.totalorder %s26, 1
      %p70 = por %p68, %p69
      %p72 = scmp.ne.s32.totalorder %s55, %s71
      %p73 = scmp.eq.s32.totalorder %s26, 0
      %p74 = por %p72, %p73
      %s75 = ssub.s32 %s27, %s46
      %s76 = ssub.s32 %s29, %s38
      %s77 = sor.u32 %s75, %s76
      %p78 = scmp.eq.s32.totalorder %s77, 0
      %s80 = sadd.s32 %s79, 1
      %s81 = scalar_select %p78, %s79, %s80
      %p84 = pneg %p78
      %p85 = scmp.eq.s32.totalorder %s20, 1
      %p86 = por %p84, %p85
      %p87 = scmp.ne.s32.totalorder %s79, %s82
      %p88 = scmp.eq.s32.totalorder %s20, 0
      %p89 = por %p87, %p88
      %p90 = scmp.ne.s32.totalorder %s79, %s82
      %p91 = scmp.eq.s32.totalorder %s25, 1
      %p92 = por %p90, %p91
      %p93 = scmp.ne.s32.totalorder %s82, %s83
      %p94 = scmp.eq.s32.totalorder %s25, 0
      %p95 = por %p93, %p94
      %p96 = scmp.ne.s32.totalorder %s82, %s83
      %p97 = scmp.eq.s32.totalorder %s26, 1
      %p98 = por %p96, %p97
      %p100 = scmp.ne.s32.totalorder %s83, %s99
      %p101 = scmp.eq.s32.totalorder %s26, 0
      %p102 = por %p100, %p101
      %s103 = ssub.s32 %s27, %s46
      %s104 = ssub.s32 %s28, %s42
      %s105 = sor.u32 %s103, %s104
      %s106 = ssub.s32 %s29, %s38
      %s107 = sor.u32 %s105, %s106
      %p108 = scmp.eq.s32.totalorder %s107, 0
      %s110 = sadd.s32 %s109, 1
      %s111 = scalar_select %p108, %s109, %s110
      %p114 = pneg %p108
      %p115 = scmp.eq.s32.totalorder %s20, 1
      %p116 = por %p114, %p115
      %p117 = scmp.ne.s32.totalorder %s109, %s112
      %p118 = scmp.eq.s32.totalorder %s20, 0
      %p119 = por %p117, %p118
      %p120 = scmp.ne.s32.totalorder %s109, %s112
      %p121 = scmp.eq.s32.totalorder %s25, 1
      %p122 = por %p120, %p121
      %p123 = scmp.ne.s32.totalorder %s112, %s113
      %p124 = scmp.eq.s32.totalorder %s25, 0
      %p125 = por %p123, %p124
      %p126 = scmp.ne.s32.totalorder %s112, %s113
      %p127 = scmp.eq.s32.totalorder %s26, 1
      %p128 = por %p126, %p127
      %p130 = scmp.ne.s32.totalorder %s113, %s129
      %p131 = scmp.eq.s32.totalorder %s26, 0
      %p132 = por %p130, %p131
      %s133 = ssub.s32 %s27, %s46
      %p134 = scmp.eq.s32.totalorder %s133, 0
      %s136 = sadd.s32 %s135, 1
      %s137 = scalar_select %p134, %s135, %s136
      %p140 = pneg %p134
      %p141 = scmp.eq.s32.totalorder %s20, 1
      %p142 = por %p140, %p141
      %p143 = scmp.ne.s32.totalorder %s135, %s138
      %p144 = scmp.eq.s32.totalorder %s20, 0
      %p145 = por %p143, %p144
      %p146 = scmp.ne.s32.totalorder %s135, %s138
      %p147 = scmp.eq.s32.totalorder %s25, 1
      %p148 = por %p146, %p147
      %p149 = scmp.ne.s32.totalorder %s138, %s139
      %p150 = scmp.eq.s32.totalorder %s25, 0
      %p151 = por %p149, %p150
      %p152 = scmp.ne.s32.totalorder %s138, %s139
      %p153 = scmp.eq.s32.totalorder %s26, 1
      %p154 = por %p152, %p153
      %p156 = scmp.ne.s32.totalorder %s139, %s155
      %p157 = scmp.eq.s32.totalorder %s26, 0
      %p158 = por %p156, %p157
      %s159 = ssub.s32 %s27, %s46
      %s160 = ssub.s32 %s28, %s42
      %s161 = sor.u32 %s159, %s160
      %s162 = ssub.s32 %s29, %s38
      %s163 = sor.u32 %s161, %s162
      %p164 = scmp.eq.s32.totalorder %s163, 0
      %s166 = sadd.s32 %s165, 1
      %s167 = scalar_select %p164, %s165, %s166
      %p170 = pneg %p164
      %p171 = scmp.eq.s32.totalorder %s20, 1
      %p172 = por %p170, %p171
      %p173 = scmp.ne.s32.totalorder %s165, %s168
      %p174 = scmp.eq.s32.totalorder %s20, 0
      %p175 = por %p173, %p174
      %p176 = scmp.ne.s32.totalorder %s165, %s168
      %p177 = scmp.eq.s32.totalorder %s25, 1
      %p178 = por %p176, %p177
      %p179 = scmp.ne.s32.totalorder %s168, %s169
      %p180 = scmp.eq.s32.totalorder %s25, 0
      %p181 = por %p179, %p180
      %p182 = scmp.ne.s32.totalorder %s168, %s169
      %p183 = scmp.eq.s32.totalorder %s26, 1
      %p184 = por %p182, %p183
      %p186 = scmp.ne.s32.totalorder %s169, %s185
      %p187 = scmp.eq.s32.totalorder %s26, 0
      %p188 = por %p186, %p187
      %p189 = scmp.le.s32.totalorder 1, %s20
      %p190 = scmp.lt.s32.totalorder %s20, 3
      %p191 = pnand %p189, %p190
      %p192 = pneg %p191
      // Predicated region
      $region9: #{tpu_custom_call.1} parent=5 // pred_check
        _
      $region10: #{tpu_custom_call.1} parent=5 // pred_check_branch
        %194 = sbr.rel (%p191) target = $region12
      $region11: #{tpu_custom_call.1} parent=5 // pred_region
        %s195 = ssub.s32 %s20, 1
      $region12: #{tpu_custom_call.1} parent=5 // pred_fallthru
        _
      %p196 = scmp.lt.s32.totalorder %s20, 2
      // Predicated region
      $region13: #{tpu_custom_call.1} parent=5 // pred_check
        %p197 = pneg %p196
      $region14: #{tpu_custom_call.1} parent=5 // pred_check_branch
        %199 = sbr.rel (%p197) target = $region16
      $region15: #{tpu_custom_call.1} parent=5 // pred_region
        // Predicated region
        $region17: #{tpu_custom_call.1} parent=15 // pred_check
          %p200 = pneg %p61
        $region18: #{tpu_custom_call.1} parent=15 // pred_check_branch
          %202 = sbr.rel (%p200) target = $region20
        $region19: #{tpu_custom_call.1} parent=15 // pred_region
          %s203 = sand.u32 %s51, 1
          %s204 = scalar_lea.sflag [#allocation3], %s203
          %s205 = sand.u32 %s51, 1
          %s206 = smul.addr %s205, 8
          %s207 = scalar_lea.vmem [#allocation2], %s206
          %s209 = ssub.s32 128, 128
          %210 = vsyncadd %s204, %s209
          %s211 = sadd.s32 %s28, %s27
          %s212 = smul.addr %s211, 128
          %s213 = scalar_lea.hbm %s0, %s212
          %s215 = sshll.u32 %s207, 4
          %s216 = int_to_ptr.vmem [resolvable:$true] %s215
          %218 = dma.hbm_to_vmem [thread:$0]  %s213, 128, %s216, %s204
        $region20: #{tpu_custom_call.1} parent=15 // pred_fallthru
          _
        // Predicated region
        $region21: #{tpu_custom_call.1} parent=15 // pred_check
          %p219 = pneg %p89
        $region22: #{tpu_custom_call.1} parent=15 // pred_check_branch
          %221 = sbr.rel (%p219) target = $region24
        $region23: #{tpu_custom_call.1} parent=15 // pred_region
          %s222 = sand.u32 %s20, 1
          %s223 = scalar_lea.sflag [#allocation6], %s222
          %s224 = sand.u32 %s79, 1
          %s225 = smul.addr %s224, 16
          %s226 = scalar_lea.vmem [#allocation5], %s225
          %s227 = smul.u32 2, %s29
          %s229 = ssub.s32 256, 256
          %230 = vsyncadd %s223, %s229
          %s231 = smul.addr %s27, 2
          %s232 = sadd.s32 %s227, %s231
          %s233 = smul.addr %s232, 128
          %s234 = scalar_lea.hbm %s1, %s233
          %s235 = sshll.u32 %s226, 4
          %s236 = int_to_ptr.vmem [resolvable:$true] %s235
          %241 = dma.hbm_to_vmem [thread:$0]  %s234, 256, %s236, %s223, 128, 128, 8
        $region24: #{tpu_custom_call.1} parent=15 // pred_fallthru
          _
        // Predicated region
        $region25: #{tpu_custom_call.1} parent=15 // pred_check
          %p242 = pneg %p119
        $region26: #{tpu_custom_call.1} parent=15 // pred_check_branch
          %244 = sbr.rel (%p242) target = $region28
        $region27: #{tpu_custom_call.1} parent=15 // pred_region
          %s245 = sand.u32 %s20, 1
          %s246 = scalar_lea.sflag [#allocation6], %s245
          %s247 = sand.u32 %s109, 1
          %s248 = smul.addr %s247, 8
          %s249 = scalar_lea.vmem [#allocation7], %s248
          %s251 = ssub.s32 128, 128
          %252 = vsyncadd %s246, %s251
          %s253 = sadd.s32 %s29, %s28
          %s254 = sadd.s32 %s253, %s27
          %s255 = smul.addr %s254, 128
          %s256 = scalar_lea.hbm %s2, %s255
          %s258 = sshll.u32 %s249, 4
          %s259 = int_to_ptr.vmem [resolvable:$true] %s258
          %261 = dma.hbm_to_vmem [thread:$0]  %s256, 128, %s259, %s246
        $region28: #{tpu_custom_call.1} parent=15 // pred_fallthru
          _
      $region16: #{tpu_custom_call.1} parent=5 // pred_fallthru
        _
      %p262 = scmp.le.s32.totalorder 1, %s20
      %p263 = scmp.lt.s32.totalorder %s20, 3
      %p264 = pnand %p262, %p263
      %p265 = pneg %p264
      // Predicated region
      $region29: #{tpu_custom_call.1} parent=5 // pred_check
        _
      $region30: #{tpu_custom_call.1} parent=5 // pred_check_branch
        %267 = sbr.rel (%p264) target = $region32
      $region31: #{tpu_custom_call.1} parent=5 // pred_region
        %s268 = ssub.s32 %s20, 1
        %s269 = sand.u32 %s54, 1
        %s270 = scalar_lea.sflag [#allocation3], %s269
        %s271 = sand.u32 %s54, 1
        %s272 = smul.addr %s271, 8
        %s273 = scalar_lea.vmem [#allocation2], %s272
        // Predicated region
        $region33: #{tpu_custom_call.1} parent=31 // pred_check
          %p274 = pneg %p67
        $region34: #{tpu_custom_call.1} parent=31 // pred_check_branch
          %276 = sbr.rel (%p274) target = $region36
        $region35: #{tpu_custom_call.1} parent=31 // pred_region
          %277 = dma.done %s270, 128
        $region36: #{tpu_custom_call.1} parent=31 // pred_fallthru
          _
        %s278 = sand.u32 %s25, 1
        %s279 = scalar_lea.sflag [#allocation6], %s278
        %s280 = sand.u32 %s82, 1
        %s281 = smul.addr %s280, 16
        %s282 = scalar_lea.vmem [#allocation5], %s281
        // Predicated region
        $region37: #{tpu_custom_call.1} parent=31 // pred_check
          %p283 = pneg %p95
        $region38: #{tpu_custom_call.1} parent=31 // pred_check_branch
          %285 = sbr.rel (%p283) target = $region40
        $region39: #{tpu_custom_call.1} parent=31 // pred_region
          %286 = dma.done %s279, 256
        $region40: #{tpu_custom_call.1} parent=31 // pred_fallthru
          _
        %s287 = sand.u32 %s25, 1
        %s288 = scalar_lea.sflag [#allocation6], %s287
        %s289 = sand.u32 %s112, 1
        %s290 = smul.addr %s289, 8
        %s291 = scalar_lea.vmem [#allocation7], %s290
        // Predicated region
        $region41: #{tpu_custom_call.1} parent=31 // pred_check
          %p292 = pneg %p125
        $region42: #{tpu_custom_call.1} parent=31 // pred_check_branch
          %294 = sbr.rel (%p292) target = $region44
        $region43: #{tpu_custom_call.1} parent=31 // pred_region
          %295 = dma.done %s288, 128
        $region44: #{tpu_custom_call.1} parent=31 // pred_fallthru
          _
        %s296 = sand.u32 %s54, 1
        %s297 = scalar_lea.sflag [#allocation3], %s296
        %s298 = sand.u32 %s54, 1
        %s299 = smul.addr %s298, 8
        %s300 = scalar_lea.vmem [#allocation2], %s299
        %p301 = pneg %p67
        %p302 = pneg %p64
        %s303 = sand.u32 %s25, 1
        %s304 = scalar_lea.sflag [#allocation6], %s303
        %s305 = sand.u32 %s82, 1
        %s306 = smul.addr %s305, 16
        %s307 = scalar_lea.vmem [#allocation5], %s306
        %p308 = pneg %p95
        %p309 = pneg %p92
        %s310 = sand.u32 %s25, 1
        %s311 = scalar_lea.sflag [#allocation6], %s310
        %s312 = sand.u32 %s112, 1
        %s313 = smul.addr %s312, 8
        %s314 = scalar_lea.vmem [#allocation7], %s313
        %p315 = pneg %p125
        %p316 = pneg %p122
        %p317 = pneg %p151
        %p318 = pneg %p148
        %p319 = scmp.lt.s32.totalorder %s30, 1
        %s320 = scalar_select %p319, %s30, 1
        %s321 = scalar_lea.vmem %s3, %s320
        %p322 = pneg %p181
        %p323 = pneg %p178
        %s324 = sand.u32 %s168, 1
        %s325 = scalar_lea.sflag [#allocation4], %s324
        %s326 = sand.u32 %s168, 1
        %s327 = smul.addr %s326, 8
        %s328 = scalar_lea.vmem [#allocation8], %s327
        %s329 = smul.u32 2, %s32
        %p330 = scmp.lt.s32.totalorder %s30, 1
        %s331 = scalar_select %p330, %s30, 1
        %s332 = scalar_lea.vmem %s3, %s331
        %v333 = vld [vmem:[%s273] sm:$0xff]
        %v334 = vld [vmem:[%s282] sm:$0xff]
        %v335 = vld [vmem:[%s282 + $0x8] sm:$0xff]
        %v336 = vmul.f32 %v333, %v333
        %vm337 = vcmask 261120
        %v338 = vsel %vm337, %v336, 0.0
        %339 = vadd.xlane.f32.xlu0 %v338
        %v340 = vpop.xlane.xlu0 %339
        %v341 = vmul.f32 %v334, %v334
        %v342 = vmul.f32 %v335, %v335
        %v343 = vsel %vm337, %v341, 0.0
        %344 = vadd.xlane.f32.xlu0 %v343
        %v345 = vpop.xlane.xlu0 %344
        %v346 = vsel %vm337, %v342, 0.0
        %347 = vadd.xlane.f32.xlu0 %v346
        %v348 = vpop.xlane.xlu0 %347
        %v350 = vsel %vm337, %v333, 0
        %v353 = vsel %vm337, %v334, 0
        %v356 = vsel %vm337, %v335, 0
        %358 = vmatprep.subr.mxu0 0.0
        %359 = vmatpush1.xpose.msra.mxu0 %v353
        %360 = vmatprep.subr.mxu0 0.0
        %361 = vmatpush1.xpose.msra.mxu0 %v356
        %362 = vmatprep.subr.mxu0 0.0
        %363 = vmatpush1.xpose.msra.mxu0 0.0
        %364 = vmatprep.subr.mxu0 0.0
        %365 = vmatpush1.xpose.msra.mxu0 0.0
        %366 = vmatprep.subr.mxu0 0.0
        %367 = vmatpush1.xpose.msra.mxu0 0.0
        %368 = vmatprep.subr.mxu0 0.0
        %369 = vmatpush1.xpose.msra.mxu0 0.0
        %370 = vmatprep.subr.mxu0 0.0
        %371 = vmatpush1.xpose.msra.mxu0 0.0
        %372 = vmatprep.subr.mxu0 0.0
        %373 = vmatpush1.xpose.msra.mxu0 0.0
        %374 = vmatprep.subr.mxu0 0.0
        %375 = vmatpush1.xpose.msra.mxu0 0.0
        %376 = vmatprep.subr.mxu0 0.0
        %377 = vmatpush1.xpose.msra.mxu0 0.0
        %378 = vmatprep.subr.mxu0 0.0
        %379 = vmatpush1.xpose.msra.mxu0 0.0
        %380 = vmatprep.subr.mxu0 0.0
        %381 = vmatpush1.xpose.msra.mxu0 0.0
        %382 = vmatprep.subr.mxu0 0.0
        %383 = vmatpush1.xpose.msra.mxu0 0.0
        %384 = vmatprep.subr.mxu0 0.0
        %385 = vmatpush1.xpose.msra.mxu0 0.0
        %386 = vmatprep.subr.mxu0 0.0
        %387 = vmatpush1.xpose.msra.mxu0 0.0
        %388 = vmatprep.subr.mxu0 0.0
        %389 = vmatpush1.xpose.msra.mxu0 0.0
        %390 = vmatprep.subr.mxu0 0.0
        %391 = vmatpush1.xpose.msra.mxu0 0.0
        %392 = vmatprep.subr.mxu0 0.0
        %393 = vmatpush1.xpose.msra.mxu0 0.0
        %394 = vmatprep.subr.mxu0 0.0
        %395 = vmatpush1.xpose.msra.mxu0 0.0
        %396 = vmatprep.subr.mxu0 0.0
        %397 = vmatpush1.xpose.msra.mxu0 0.0
        %398 = vmatprep.subr.mxu0 0.0
        %399 = vmatpush1.xpose.msra.mxu0 0.0
        %400 = vmatprep.subr.mxu0 0.0
        %401 = vmatpush1.xpose.msra.mxu0 0.0
        %402 = vmatprep.subr.mxu0 0.0
        %403 = vmatpush1.xpose.msra.mxu0 0.0
        %404 = vmatprep.subr.mxu0 0.0
        %405 = vmatpush1.xpose.msra.mxu0 0.0
        %406 = vmatprep.subr.mxu0 0.0
        %407 = vmatpush1.xpose.msra.mxu0 0.0
        %408 = vmatprep.subr.mxu0 0.0
        %409 = vmatpush1.xpose.msra.mxu0 0.0
        %410 = vmatprep.subr.mxu0 0.0
        %411 = vmatpush1.xpose.msra.mxu0 0.0
        %412 = vmatprep.subr.mxu0 0.0
        %413 = vmatpush1.xpose.msra.mxu0 0.0
        %414 = vmatprep.subr.mxu0 0.0
        %415 = vmatpush1.xpose.msra.mxu0 0.0
        %416 = vmatprep.subr.mxu0 0.0
        %417 = vmatpush1.xpose.msra.mxu0 0.0
        %418 = vmatprep.subr.mxu0 0.0
        %419 = vmatpush1.xpose.msra.mxu0 0.0
        %420 = vmatprep.subr.mxu0 0.0
        %421 = vmatpush1.xpose.msra.mxu0 0.0
        %422 = vmatprep.mubr.f32.mxu0 0.0
        %423 = vmatmul.mubr.f32.gmra.mrb[0].mxu0 %v350
        %v424 = vpop.f32.mrb[0].mxu0
        %v425 = vadd.f32 0.0, %v424
        %v426 = vpop.f32.mrb[0].mxu0
        %427 = vdwg.mxu0
        %428 = vxpose.xlu0.b32.start [1/16] %v345, 128
        %429 = vxpose.xlu0.b32.cont [2/16] %v348, 128
        %430 = vxpose.xlu0.b32.cont [3/16] 0.0, 128
        %431 = vxpose.xlu0.b32.cont [4/16] 0.0, 128
        %432 = vxpose.xlu0.b32.cont [5/16] 0.0, 128
        %433 = vxpose.xlu0.b32.cont [6/16] 0.0, 128
        %434 = vxpose.xlu0.b32.cont [7/16] 0.0, 128
        %435 = vxpose.xlu0.b32.cont [8/16] 0.0, 128
        %436 = vxpose.xlu0.b32.cont [9/16] 0.0, 128
        %437 = vxpose.xlu0.b32.cont [10/16] 0.0, 128
        %438 = vxpose.xlu0.b32.cont [11/16] 0.0, 128
        %439 = vxpose.xlu0.b32.cont [12/16] 0.0, 128
        %440 = vxpose.xlu0.b32.cont [13/16] 0.0, 128
        %441 = vxpose.xlu0.b32.cont [14/16] 0.0, 128
        %442 = vxpose.xlu0.b32.cont [15/16] 0.0, 128
        %443 = vxpose.xlu0.b32.end [16/16] 0.0, 128
        %v444 = vpop.trf.xlu0
        %v445 = vpop.trf.xlu0
        %v446 = vpop.trf.xlu0
        %v447 = vpop.trf.xlu0
        %v448 = vpop.trf.xlu0
        %v449 = vpop.trf.xlu0
        %v450 = vpop.trf.xlu0
        %v451 = vpop.trf.xlu0
        %v452 = vpop.trf.xlu0
        %v453 = vpop.trf.xlu0
        %v454 = vpop.trf.xlu0
        %v455 = vpop.trf.xlu0
        %v456 = vpop.trf.xlu0
        %v457 = vpop.trf.xlu0
        %v458 = vpop.trf.xlu0
        %v459 = vpop.trf.xlu0
        %v460 = vlaneseq
        %v461 = vshrl.u32 %v460, 7
        %v462 = vsub.s32 0, %v461
        %v463 = vrot.slane %v444, %v462
        %v464 = vadd.f32 %v340, %v463
        %v465 = vmul.f32 %v425, 2.0
        %v466 = vsub.f32 %v464, %v465
        %v467 = vmax.f32 %v466, 0.0
        %vm468 = vcmask 130048
        %469 = vst.msk [vmem:[%s328] sm:$0xff] %vm468, %v467
        %v470 = vld [vmem:[%s291] sm:$0xff]
        %v471 = vmul.f32 %v470, %v467
        %v472 = vsel %vm468, %v471, 0.0
        %473 = vadd.xlane.f32.xlu0 %v472
        %v474 = vpop.xlane.xlu0 %473
        %v475 = vrot.slane %v474, 4
        %v476 = vadd.f32 %v474, %v475
        %v477 = vrot.slane %v476, 2
        %v478 = vadd.f32 %v476, %v477
        %v479 = vrot.slane %v478, 1
        %v480 = vadd.f32 %v478, %v479
        %s481 = vtos %v480
        %p482 = scmp.eq.s32.totalorder %s31, 0
        %p483 = scmp.eq.s32.totalorder %s32, 0
        %p484 = pnand %p482, %p483
        %p485 = pneg %p484
        // Predicated region
        $region45: #{tpu_custom_call.1} parent=31 // pred_check
          _
        $region46: #{tpu_custom_call.1} parent=31 // pred_check_branch
          %487 = sbr.rel (%p484) target = $region48
        $region47: #{tpu_custom_call.1} parent=31 // pred_region
          %vm488 = vcmask 0
          %489 = vst.msk [vmem:[%s332] sm:$0x1] %vm488, 0.0
        $region48: #{tpu_custom_call.1} parent=31 // pred_fallthru
          _
        %v490 = vld [vmem:[%s332] sm:$0x1]
        %v491 = vstv %s481
        %v492 = vadd.f32 %v490, %v491
        %vm493 = vcmask 0
        %494 = vst.msk [vmem:[%s332] sm:$0x1] %vm493, %v492
        %p495 = scmp.lt.s32.totalorder %s30, 1
        %s496 = scalar_select %p495, %s30, 1
        %s497 = scalar_lea.vmem %s3, %s496
        %s498 = sand.u32 %s168, 1
        %s499 = scalar_lea.sflag [#allocation4], %s498
        %s500 = sand.u32 %s168, 1
        %s501 = smul.addr %s500, 8
        %s502 = scalar_lea.vmem [#allocation8], %s501
        // Predicated region
        $region49: #{tpu_custom_call.1} parent=31 // pred_check
          %p503 = pneg %p148
        $region50: #{tpu_custom_call.1} parent=31 // pred_check_branch
          %505 = sbr.rel (%p503) target = $region52
        $region51: #{tpu_custom_call.1} parent=31 // pred_region
          _
        $region52: #{tpu_custom_call.1} parent=31 // pred_fallthru
          _
        // Predicated region
        $region53: #{tpu_custom_call.1} parent=31 // pred_check
          %p506 = pneg %p178
        $region54: #{tpu_custom_call.1} parent=31 // pred_check_branch
          %508 = sbr.rel (%p506) target = $region56
        $region55: #{tpu_custom_call.1} parent=31 // pred_region
          %s510 = ssub.s32 128, 128
          %511 = vsyncadd %s499, %s510
          %s512 = sadd.s32 %s32, %s31
          %s513 = sadd.s32 %s512, %s30
          %s514 = smul.addr %s513, 128
          %s515 = scalar_lea.hbm %s4, %s514
          %s517 = sshll.u32 %s502, 4
          %s518 = int_to_ptr.vmem [resolvable:$true] %s517
          %520 = dma.vmem_to_hbm [thread:$0]  %s518, 128, %s515, %s499
        $region56: #{tpu_custom_call.1} parent=31 // pred_fallthru
          _
      $region32: #{tpu_custom_call.1} parent=5 // pred_fallthru
        _
      %p521 = scmp.le.s32.totalorder 2, %s20
      // Predicated region
      $region57: #{tpu_custom_call.1} parent=5 // pred_check
        %p522 = pneg %p521
      $region58: #{tpu_custom_call.1} parent=5 // pred_check_branch
        %524 = sbr.rel (%p522) target = $region60
      $region59: #{tpu_custom_call.1} parent=5 // pred_region
        %s525 = ssub.s32 %s20, 2
        // Predicated region
        $region61: #{tpu_custom_call.1} parent=59 // pred_check
          %p526 = pneg %p154
        $region62: #{tpu_custom_call.1} parent=59 // pred_check_branch
          %528 = sbr.rel (%p526) target = $region64
        $region63: #{tpu_custom_call.1} parent=59 // pred_region
          %p529 = scmp.lt.s32.totalorder %s33, 1
          %s530 = scalar_select %p529, %s33, 1
          %s531 = scalar_lea.vmem %s3, %s530
        $region64: #{tpu_custom_call.1} parent=59 // pred_fallthru
          _
        // Predicated region
        $region65: #{tpu_custom_call.1} parent=59 // pred_check
          %p532 = pneg %p184
        $region66: #{tpu_custom_call.1} parent=59 // pred_check_branch
          %534 = sbr.rel (%p532) target = $region68
        $region67: #{tpu_custom_call.1} parent=59 // pred_region
          %s535 = sand.u32 %s169, 1
          %s536 = scalar_lea.sflag [#allocation4], %s535
          %s537 = sand.u32 %s169, 1
          %s538 = smul.addr %s537, 8
          %s539 = scalar_lea.vmem [#allocation8], %s538
          %540 = dma.done %s536, 128
        $region68: #{tpu_custom_call.1} parent=59 // pred_fallthru
          _
      $region60: #{tpu_custom_call.1} parent=5 // pred_fallthru
        _
    $region6: #{tpu_custom_call.1} parent=1 // loop_footer
      %s24 = sadd.s32 1, %s20
    $region7: #{tpu_custom_call.1} parent=1 // loop_footer_branch
      %19 = sbr.rel target = $region3
    $region8: #{tpu_custom_call.1} parent=1 // loop_exit
      _
    %541 = vsyncpa [#allocation3], 1
    %s542 = scalar_lea.sflag [#allocation3], 1
    %543 = vsyncpa %s542, 1
    %544 = vsyncpa [#allocation6], 1
    %s545 = scalar_lea.sflag [#allocation6], 1
    %546 = vsyncpa %s545, 1
    %547 = vsyncpa [#allocation4], 1
    %s548 = scalar_lea.sflag [#allocation4], 1
    %549 = vsyncpa %s548, 1

</llo_original>
